<compile_context>
chip_gen: v7x
topology: tpu7x:2x2x1
jax: 0.10.0
libtpu: 0.0.40
codegen_flags: <defaults>
</compile_context>

<pallas_src>
import jax
import jax.numpy as jnp
from jax.experimental import pallas as pl
from jax.experimental.pallas import tpu as pltpu


def _mlp_kernel(x_ref, w1_ref, b1_ref, w2_ref, b2_ref, o_ref):
    # x_ref:  (TILE, P*K)    streamed packed batch tile
    # w1_ref: (P*K, P*H)     block-diagonal, VMEM-resident across grid steps
    # b1_ref: (1, P*H)
    # w2_ref: (P*H, P*O)     block-diagonal, resident
    # b2_ref: (1, P*O)
    # o_ref:  (TILE, P*O)
    x = x_ref[...]

    # layer1 + tanh (features()):  x @ W1 + b1   (weights already in (in, out) layout)
    h = jnp.tanh(
        jnp.dot(x, w1_ref[...], preferred_element_type=jnp.float32) + b1_ref[...]
    )

    # classifier:  h @ W2 + b2
    out = (
        jnp.dot(h.astype(w2_ref.dtype), w2_ref[...], preferred_element_type=jnp.float32)
        + b2_ref[...]
    )
    o_ref[...] = out.astype(o_ref.dtype)


def classification_model_forward(x, w1, b1, w2, b2, *, pack=12, tile_rows=1024,
                                 use_bf16=False):
    """Forward pass of ClassificationModel.

    x : (B, num_inputs) float32
    w1: (n_hidden, num_inputs), b1: (n_hidden,)      -- PyTorch Linear layout
    w2: (num_outputs, n_hidden), b2: (num_outputs,)
    """
    B, K = x.shape
    H = w1.shape[0]
    O = w2.shape[0]

    # Pack factor: fold P batch rows into the contraction dim, keeping the packed
    # K/H depth <= 128 (single MXU pass on all generations).
    P = max(1, min(pack, 128 // max(K, H)))

    KP, HP, OP = P * K, P * H, P * O

    # Block-diagonal weights in (in, out) layout (kron(I_P, W^T)): tiny one-time
    # XLA ops on weight arrays, outside the hot kernel. No in-kernel transposes.
    dt = x.dtype
    eye_p = jnp.eye(P, dtype=dt)
    w1_blk = jnp.kron(eye_p, w1.T.astype(dt))            # (P*K, P*H)
    w2_blk = jnp.kron(eye_p, w2.T.astype(dt))            # (P*H, P*O)
    b1_blk = jnp.tile(b1.astype(jnp.float32), P).reshape(1, HP)   # (1, P*H)
    b2_blk = jnp.tile(b2.astype(jnp.float32), P).reshape(1, OP)   # (1, P*O)

    # Packed-row tiling: pick tile, pad B (once) so packed rows divide evenly.
    R = pl.cdiv(B, P)                                # packed rows needed
    if R > tile_rows:
        TILE = tile_rows
    else:
        TILE = max(8, pl.cdiv(R, 8) * 8)             # sublane-multiple for tiny batches
    R_pad = pl.cdiv(R, TILE) * TILE
    B_pad = R_pad * P
    if B_pad != B:
        x = jnp.pad(x, ((0, B_pad - B), (0, 0)))     # single pad; skipped if even
    xp = x.reshape(R_pad, KP)                        # free row-major reshape

    if use_bf16:
        # Optional: halve input HBM read + single-pass bf16 MXU (loosen tolerance).
        xp = xp.astype(jnp.bfloat16)
        w1_blk = w1_blk.astype(jnp.bfloat16)
        w2_blk = w2_blk.astype(jnp.bfloat16)

    grid = (R_pad // TILE,)

    out = pl.pallas_call(
        _mlp_kernel,
        out_shape=jax.ShapeDtypeStruct((R_pad, OP), jnp.float32),
        grid_spec=pltpu.PrefetchScalarGridSpec(
            num_scalar_prefetch=0,
            grid=grid,
            in_specs=[
                # Streamed packed batch tile (double-buffered by Pallas).
                pl.BlockSpec((TILE, KP), lambda i: (i, 0)),
                # Weights / biases: constant index_map -> DMA'd once, VMEM-resident.
                pl.BlockSpec((KP, HP), lambda i: (0, 0)),
                pl.BlockSpec((1, HP), lambda i: (0, 0)),
                pl.BlockSpec((HP, OP), lambda i: (0, 0)),
                pl.BlockSpec((1, OP), lambda i: (0, 0)),
            ],
            # Unpadded output: last dim == full array dim, so no 128-lane HBM waste.
            out_specs=pl.BlockSpec((TILE, OP), lambda i: (i, 0)),
        ),
        compiler_params=pltpu.CompilerParams(
            # Packed-row tiles are independent: shard across TensorCores on v7x.
            dimension_semantics=("parallel",),
        ),
    )(xp, w1_blk, b1_blk, w2_blk, b2_blk)

    # (R_pad, P*O) -> (B_pad, O) is a free row-major reshape; slice off padded rows.
    out = out.reshape(B_pad, O)
    if B_pad != B:
        out = out[:B]
    return out


def init_params(key, num_inputs=10, n_hidden=10, num_outputs=3):
    """Deterministic PyTorch-style Linear init: U(-1/sqrt(fan_in), 1/sqrt(fan_in))."""
    k1, k2, k3, k4 = jax.random.split(key, 4)
    bound1 = 1.0 / (num_inputs ** 0.5)
    bound2 = 1.0 / (n_hidden ** 0.5)
    w1 = jax.random.uniform(k1, (n_hidden, num_inputs), jnp.float32, -bound1, bound1)
    b1 = jax.random.uniform(k2, (n_hidden,), jnp.float32, -bound1, bound1)
    w2 = jax.random.uniform(k3, (num_outputs, n_hidden), jnp.float32, -bound2, bound2)
    b2 = jax.random.uniform(k4, (num_outputs,), jnp.float32, -bound2, bound2)
    return w1, b1, w2, b2


if __name__ == "__main__":
    key = jax.random.PRNGKey(0)
    k_param, k_x = jax.random.split(key)

    num_inputs, n_hidden, num_outputs = 10, 10, 3
    batch = 8

    w1, b1, w2, b2 = init_params(k_param, num_inputs, n_hidden, num_outputs)
    x = jax.random.normal(k_x, (batch, num_inputs), jnp.float32)

    out = classification_model_forward(x, w1, b1, w2, b2)
    out = jax.block_until_ready(out)

    # Reference check in plain JAX (same math as the PyTorch module).
    ref = jnp.tanh(x @ w1.T + b1) @ w2.T + b2
    assert out.shape == (batch, num_outputs)
    assert jnp.allclose(out, ref, atol=1e-5, rtol=1e-5)

    print("KERNEL_OK")
</pallas_src>

<mosaic_0001>
module attributes {stable_mosaic.version = 11 : i64} {
  func.func @_mlp_kernel(%arg0: i32, %arg1: memref<8x120xf32, #tpu.memory_space<vmem>>, %arg2: memref<120x120xf32, #tpu.memory_space<vmem>>, %arg3: memref<1x120xf32, #tpu.memory_space<vmem>>, %arg4: memref<120x36xf32, #tpu.memory_space<vmem>>, %arg5: memref<1x36xf32, #tpu.memory_space<vmem>>, %arg6: memref<8x36xf32, #tpu.memory_space<vmem>>) attributes {dimension_semantics = [#tpu.dimension_semantics<parallel>], iteration_bounds = array<i64: 1>, scalar_prefetch = 0 : i64, scratch_operands = 0 : i64, tpu.core_type = #tpu.core_type<tc>, window_params = [{transform_indices = @transform_0, window_bounds = array<i64: 8, 120>}, {pipeline_mode = #tpu.pipeline_mode<synchronous>, transform_indices = @transform_1, window_bounds = array<i64: 120, 120>}, {pipeline_mode = #tpu.pipeline_mode<synchronous>, transform_indices = @transform_2, window_bounds = array<i64: 1, 120>}, {pipeline_mode = #tpu.pipeline_mode<synchronous>, transform_indices = @transform_3, window_bounds = array<i64: 120, 36>}, {pipeline_mode = #tpu.pipeline_mode<synchronous>, transform_indices = @transform_4, window_bounds = array<i64: 1, 36>}, {transform_indices = @transform_5, window_bounds = array<i64: 8, 36>}]} {
    %c0 = arith.constant 0 : index
    %c0_0 = arith.constant 0 : index
    %0 = vector.load %arg1[%c0, %c0_0] : memref<8x120xf32, #tpu.memory_space<vmem>>, vector<8x120xf32>
    %c0_1 = arith.constant 0 : index
    %c0_2 = arith.constant 0 : index
    %1 = vector.load %arg2[%c0_1, %c0_2] : memref<120x120xf32, #tpu.memory_space<vmem>>, vector<120x120xf32>
    %cst = arith.constant dense<0.000000e+00> : vector<8x120xf32>
    %2 = tpu.matmul %0, %1, %cst {dimension_numbers = #tpu.dot_dimension_numbers<[1], [0], [0], [1], [0, 0, 1, 1], [], []>} : vector<8x120xf32>, vector<120x120xf32>, vector<8x120xf32> -> vector<8x120xf32>
    %c0_3 = arith.constant 0 : index
    %c0_4 = arith.constant 0 : index
    %3 = vector.load %arg3[%c0_3, %c0_4] : memref<1x120xf32, #tpu.memory_space<vmem>>, vector<1x120xf32>
    %4 = vector.broadcast %3 : vector<1x120xf32> to vector<8x120xf32>
    %5 = arith.addf %2, %4 : vector<8x120xf32>
    %6 = math.tanh %5 : vector<8x120xf32>
    %c0_5 = arith.constant 0 : index
    %c0_6 = arith.constant 0 : index
    %7 = vector.load %arg4[%c0_5, %c0_6] : memref<120x36xf32, #tpu.memory_space<vmem>>, vector<120x36xf32>
    %cst_7 = arith.constant dense<0.000000e+00> : vector<8x36xf32>
    %8 = tpu.matmul %6, %7, %cst_7 {dimension_numbers = #tpu.dot_dimension_numbers<[1], [0], [0], [1], [0, 0, 1, 1], [], []>} : vector<8x120xf32>, vector<120x36xf32>, vector<8x36xf32> -> vector<8x36xf32>
    %c0_8 = arith.constant 0 : index
    %c0_9 = arith.constant 0 : index
    %9 = vector.load %arg5[%c0_8, %c0_9] : memref<1x36xf32, #tpu.memory_space<vmem>>, vector<1x36xf32>
    %10 = vector.broadcast %9 : vector<1x36xf32> to vector<8x36xf32>
    %11 = arith.addf %8, %10 : vector<8x36xf32>
    %c0_10 = arith.constant 0 : index
    %c0_11 = arith.constant 0 : index
    %12 = vector.load %arg6[%c0_10, %c0_11] : memref<8x36xf32, #tpu.memory_space<vmem>>, vector<8x36xf32>
    tpu.vector_store %arg6[%c0_10, %c0_11], %11 {strides = array<i32>} : memref<8x36xf32, #tpu.memory_space<vmem>>, vector<8x36xf32>,
    return
  }
  func.func @transform_0(%arg0: i32) -> (i32, i32) {
    %c0_i32 = arith.constant 0 : i32
    %c0_i32_0 = arith.constant 0 : i32
    return %arg0, %c0_i32 : i32, i32
  }
  func.func @transform_1(%arg0: i32) -> (i32, i32) {
    %c0_i32 = arith.constant 0 : i32
    %c0_i32_0 = arith.constant 0 : i32
    %c0_i32_1 = arith.constant 0 : i32
    return %c0_i32, %c0_i32_0 : i32, i32
  }
  func.func @transform_2(%arg0: i32) -> (i32, i32) {
    %c0_i32 = arith.constant 0 : i32
    %c0_i32_0 = arith.constant 0 : i32
    %c0_i32_1 = arith.constant 0 : i32
    return %c0_i32, %c0_i32_0 : i32, i32
  }
  func.func @transform_3(%arg0: i32) -> (i32, i32) {
    %c0_i32 = arith.constant 0 : i32
    %c0_i32_0 = arith.constant 0 : i32
    %c0_i32_1 = arith.constant 0 : i32
    return %c0_i32, %c0_i32_0 : i32, i32
  }
  func.func @transform_4(%arg0: i32) -> (i32, i32) {
    %c0_i32 = arith.constant 0 : i32
    %c0_i32_0 = arith.constant 0 : i32
    %c0_i32_1 = arith.constant 0 : i32
    return %c0_i32, %c0_i32_0 : i32, i32
  }
  func.func @transform_5(%arg0: i32) -> (i32, i32) {
    %c0_i32 = arith.constant 0 : i32
    %c0_i32_0 = arith.constant 0 : i32
    return %arg0, %c0_i32 : i32, i32
  }
}

</mosaic_0001>

<llo_original>
// kernel: tpu_custom_call.1
$region0: #{tpu_custom_call.1}
  #allocation0 [shape = 'u32[]', space=smem, size = 0x4, offset = 0x4, fixed_abs, tag = 'smem constant byte address 0x4 - core index']
  #allocation1 [shape = 'u32[144,128]{1,0:T(1,128)}', space=vmem, size = 0x12000, scoped, tag = 'internal scratch']
  %s0 = inlined_call_operand.vmem [shape: f32[8,120], index: 0, kind: input, shape index: {}]
  %s1 = inlined_call_operand.vmem [shape: f32[120,120], index: 1, kind: input, shape index: {}]
  %s2 = inlined_call_operand.vmem [shape: f32[1,120], index: 2, kind: input, shape index: {}]
  %s3 = inlined_call_operand.vmem [shape: f32[120,36], index: 3, kind: input, shape index: {}]
  %s4 = inlined_call_operand.vmem [shape: f32[1,36], index: 4, kind: input, shape index: {}]
  %s5 = inlined_call_operand.hbm [shape: f32[8,36], index: 5, kind: output, shape index: {}]
  %s6 = sld [smem:[#allocation0]]
  $region30: #{tpu_custom_call.1} parent=0
    _
  %s8 = ssub.s32 1, %s6
  %s9 = scalar_select 0, %s8, %s6
  $region1: #{tpu_custom_call.1} parent=0
    #allocation2 [shape = 'u8[4096]{0}', space=vmem, size = 0x1000, scoped, tag = 'output window, operand 0, single buffered']
    #allocation3 [shape = 's32[1]{0}', space=sflag, size = 0x4, scoped, tag = 'scoped memory for tpu_custom_call.1']
    %10 = vsyncpa [#allocation3], 0
    // Predicated region
    $region2: #{tpu_custom_call.1} parent=1 // pred_check
      _
    $region3: #{tpu_custom_call.1} parent=1 // pred_check_branch
      %12 = sbr.rel (0) target = $region5
    $region4: #{tpu_custom_call.1} parent=1 // pred_region
      _
    $region5: #{tpu_custom_call.1} parent=1 // pred_fallthru
      _
    // Predicated region
    $region6: #{tpu_custom_call.1} parent=1 // pred_check
      _
    $region7: #{tpu_custom_call.1} parent=1 // pred_check_branch
      %14 = sbr.rel (0) target = $region9
    $region8: #{tpu_custom_call.1} parent=1 // pred_region
      _
    $region9: #{tpu_custom_call.1} parent=1 // pred_fallthru
      _
    // Predicated region
    $region10: #{tpu_custom_call.1} parent=1 // pred_check
      _
    $region11: #{tpu_custom_call.1} parent=1 // pred_check_branch
      %16 = sbr.rel (0) target = $region13
    $region12: #{tpu_custom_call.1} parent=1 // pred_region
      _
    $region13: #{tpu_custom_call.1} parent=1 // pred_fallthru
      _
    // Predicated region
    $region14: #{tpu_custom_call.1} parent=1 // pred_check
      _
    $region15: #{tpu_custom_call.1} parent=1 // pred_check_branch
      %18 = sbr.rel (0) target = $region17
    $region16: #{tpu_custom_call.1} parent=1 // pred_region
      _
    $region17: #{tpu_custom_call.1} parent=1 // pred_fallthru
      _
    // Predicated region
    $region18: #{tpu_custom_call.1} parent=1 // pred_check
      _
    $region19: #{tpu_custom_call.1} parent=1 // pred_check_branch
      %20 = sbr.rel (0) target = $region21
    $region20: #{tpu_custom_call.1} parent=1 // pred_region
      _
    $region21: #{tpu_custom_call.1} parent=1 // pred_fallthru
      _
    %v21 = vld [vmem:[%s0] sm:$0xff]
    %v22 = vld [vmem:[%s1] sm:$0xff]
    %v23 = vld [vmem:[%s1 + $0x8] sm:$0xff]
    %v24 = vld [vmem:[%s1 + $0x10] sm:$0xff]
    %v25 = vld [vmem:[%s1 + $0x18] sm:$0xff]
    %v26 = vld [vmem:[%s1 + $0x20] sm:$0xff]
    %v27 = vld [vmem:[%s1 + $0x28] sm:$0xff]
    %v28 = vld [vmem:[%s1 + $0x30] sm:$0xff]
    %v29 = vld [vmem:[%s1 + $0x38] sm:$0xff]
    %v30 = vld [vmem:[%s1 + $0x40] sm:$0xff]
    %v31 = vld [vmem:[%s1 + $0x48] sm:$0xff]
    %v32 = vld [vmem:[%s1 + $0x50] sm:$0xff]
    %v33 = vld [vmem:[%s1 + $0x58] sm:$0xff]
    %v34 = vld [vmem:[%s1 + $0x60] sm:$0xff]
    %v35 = vld [vmem:[%s1 + $0x68] sm:$0xff]
    %v36 = vld [vmem:[%s1 + $0x70] sm:$0xff]
    %v37 = vld [vmem:[%s2] sm:$0x1]
    %v39 = vlaneseq
    %v40 = vshrl.u32 %v39, 7
    %v41 = vsub.s32 0, %v40
    %v42 = vrot.slane %v37, %v41
    %vm44 = vcmask 982016
    %v46 = vsel %vm44, %v21, 0
    %48 = vmatprep.subr.mxu0 0.0
    %49 = vmatpush1.msra.mxu0 %v22
    %50 = vmatprep.subr.mxu0 0.0
    %51 = vmatpush1.msra.mxu0 %v23
    %52 = vmatprep.subr.mxu0 0.0
    %53 = vmatpush1.msra.mxu0 %v24
    %54 = vmatprep.subr.mxu0 0.0
    %55 = vmatpush1.msra.mxu0 %v25
    %56 = vmatprep.subr.mxu0 0.0
    %57 = vmatpush1.msra.mxu0 %v26
    %58 = vmatprep.subr.mxu0 0.0
    %59 = vmatpush1.msra.mxu0 %v27
    %60 = vmatprep.subr.mxu0 0.0
    %61 = vmatpush1.msra.mxu0 %v28
    %62 = vmatprep.subr.mxu0 0.0
    %63 = vmatpush1.msra.mxu0 %v29
    %64 = vmatprep.subr.mxu0 0.0
    %65 = vmatpush1.msra.mxu0 %v30
    %66 = vmatprep.subr.mxu0 0.0
    %67 = vmatpush1.msra.mxu0 %v31
    %68 = vmatprep.subr.mxu0 0.0
    %69 = vmatpush1.msra.mxu0 %v32
    %70 = vmatprep.subr.mxu0 0.0
    %71 = vmatpush1.msra.mxu0 %v33
    %72 = vmatprep.subr.mxu0 0.0
    %73 = vmatpush1.msra.mxu0 %v34
    %74 = vmatprep.subr.mxu0 0.0
    %75 = vmatpush1.msra.mxu0 %v35
    %76 = vmatprep.subr.mxu0 0.0
    %77 = vmatpush1.msra.mxu0 %v36
    %78 = vmatprep.subr.mxu0 0.0
    %79 = vmatpush1.msra.mxu0 0.0
    %80 = vmatprep.subr.mxu0 0.0
    %81 = vmatpush1.msra.mxu0 0.0
    %82 = vmatprep.subr.mxu0 0.0
    %83 = vmatpush1.msra.mxu0 0.0
    %84 = vmatprep.subr.mxu0 0.0
    %85 = vmatpush1.msra.mxu0 0.0
    %86 = vmatprep.subr.mxu0 0.0
    %87 = vmatpush1.msra.mxu0 0.0
    %88 = vmatprep.subr.mxu0 0.0
    %89 = vmatpush1.msra.mxu0 0.0
    %90 = vmatprep.subr.mxu0 0.0
    %91 = vmatpush1.msra.mxu0 0.0
    %92 = vmatprep.subr.mxu0 0.0
    %93 = vmatpush1.msra.mxu0 0.0
    %94 = vmatprep.subr.mxu0 0.0
    %95 = vmatpush1.msra.mxu0 0.0
    %96 = vmatprep.subr.mxu0 0.0
    %97 = vmatpush1.msra.mxu0 0.0
    %98 = vmatprep.subr.mxu0 0.0
    %99 = vmatpush1.msra.mxu0 0.0
    %100 = vmatprep.subr.mxu0 0.0
    %101 = vmatpush1.msra.mxu0 0.0
    %102 = vmatprep.subr.mxu0 0.0
    %103 = vmatpush1.msra.mxu0 0.0
    %104 = vmatprep.subr.mxu0 0.0
    %105 = vmatpush1.msra.mxu0 0.0
    %106 = vmatprep.subr.mxu0 0.0
    %107 = vmatpush1.msra.mxu0 0.0
    %108 = vmatprep.subr.mxu0 0.0
    %109 = vmatpush1.msra.mxu0 0.0
    %110 = vmatprep.subr.mxu0 0.0
    %111 = vmatpush1.msra.mxu0 0.0
    %112 = vmatprep.mubr.f32.mxu0 0.0
    %113 = vmatmul.mubr.f32.gmra.mrb[0].mxu0 %v46
    %v114 = vpop.f32.mrb[0].mxu0
    %v115 = vadd.f32 %v42, %v114
    %v116 = vpop.f32.mrb[0].mxu0
    %117 = vdwg.mxu0
    %v118 = vtanh.pop %v115
    %v119 = vld [vmem:[%s3] sm:$0xff]
    %v120 = vld [vmem:[%s3 + $0x8] sm:$0xff]
    %v121 = vld [vmem:[%s3 + $0x10] sm:$0xff]
    %v122 = vld [vmem:[%s3 + $0x18] sm:$0xff]
    %v123 = vld [vmem:[%s3 + $0x20] sm:$0xff]
    %v124 = vld [vmem:[%s3 + $0x28] sm:$0xff]
    %v125 = vld [vmem:[%s3 + $0x30] sm:$0xff]
    %v126 = vld [vmem:[%s3 + $0x38] sm:$0xff]
    %v127 = vld [vmem:[%s3 + $0x40] sm:$0xff]
    %v128 = vld [vmem:[%s3 + $0x48] sm:$0xff]
    %v129 = vld [vmem:[%s3 + $0x50] sm:$0xff]
    %v130 = vld [vmem:[%s3 + $0x58] sm:$0xff]
    %v131 = vld [vmem:[%s3 + $0x60] sm:$0xff]
    %v132 = vld [vmem:[%s3 + $0x68] sm:$0xff]
    %v133 = vld [vmem:[%s3 + $0x70] sm:$0xff]
    %v134 = vld [vmem:[%s4] sm:$0x1]
    %v136 = vlaneseq
    %v137 = vshrl.u32 %v136, 7
    %v138 = vsub.s32 0, %v137
    %v139 = vrot.slane %v134, %v138
    %v142 = vsel %vm44, %v118, 0
    %144 = vmatprep.subr.mxu0 0.0
    %145 = vmatpush1.msra.mxu0 %v119
    %146 = vmatprep.subr.mxu0 0.0
    %147 = vmatpush1.msra.mxu0 %v120
    %148 = vmatprep.subr.mxu0 0.0
    %149 = vmatpush1.msra.mxu0 %v121
    %150 = vmatprep.subr.mxu0 0.0
    %151 = vmatpush1.msra.mxu0 %v122
    %152 = vmatprep.subr.mxu0 0.0
    %153 = vmatpush1.msra.mxu0 %v123
    %154 = vmatprep.subr.mxu0 0.0
    %155 = vmatpush1.msra.mxu0 %v124
    %156 = vmatprep.subr.mxu0 0.0
    %157 = vmatpush1.msra.mxu0 %v125
    %158 = vmatprep.subr.mxu0 0.0
    %159 = vmatpush1.msra.mxu0 %v126
    %160 = vmatprep.subr.mxu0 0.0
    %161 = vmatpush1.msra.mxu0 %v127
    %162 = vmatprep.subr.mxu0 0.0
    %163 = vmatpush1.msra.mxu0 %v128
    %164 = vmatprep.subr.mxu0 0.0
    %165 = vmatpush1.msra.mxu0 %v129
    %166 = vmatprep.subr.mxu0 0.0
    %167 = vmatpush1.msra.mxu0 %v130
    %168 = vmatprep.subr.mxu0 0.0
    %169 = vmatpush1.msra.mxu0 %v131
    %170 = vmatprep.subr.mxu0 0.0
    %171 = vmatpush1.msra.mxu0 %v132
    %172 = vmatprep.subr.mxu0 0.0
    %173 = vmatpush1.msra.mxu0 %v133
    %174 = vmatprep.subr.mxu0 0.0
    %175 = vmatpush1.msra.mxu0 0.0
    %176 = vmatprep.subr.mxu0 0.0
    %177 = vmatpush1.msra.mxu0 0.0
    %178 = vmatprep.subr.mxu0 0.0
    %179 = vmatpush1.msra.mxu0 0.0
    %180 = vmatprep.subr.mxu0 0.0
    %181 = vmatpush1.msra.mxu0 0.0
    %182 = vmatprep.subr.mxu0 0.0
    %183 = vmatpush1.msra.mxu0 0.0
    %184 = vmatprep.subr.mxu0 0.0
    %185 = vmatpush1.msra.mxu0 0.0
    %186 = vmatprep.subr.mxu0 0.0
    %187 = vmatpush1.msra.mxu0 0.0
    %188 = vmatprep.subr.mxu0 0.0
    %189 = vmatpush1.msra.mxu0 0.0
    %190 = vmatprep.subr.mxu0 0.0
    %191 = vmatpush1.msra.mxu0 0.0
    %192 = vmatprep.subr.mxu0 0.0
    %193 = vmatpush1.msra.mxu0 0.0
    %194 = vmatprep.subr.mxu0 0.0
    %195 = vmatpush1.msra.mxu0 0.0
    %196 = vmatprep.subr.mxu0 0.0
    %197 = vmatpush1.msra.mxu0 0.0
    %198 = vmatprep.subr.mxu0 0.0
    %199 = vmatpush1.msra.mxu0 0.0
    %200 = vmatprep.subr.mxu0 0.0
    %201 = vmatpush1.msra.mxu0 0.0
    %202 = vmatprep.subr.mxu0 0.0
    %203 = vmatpush1.msra.mxu0 0.0
    %204 = vmatprep.subr.mxu0 0.0
    %205 = vmatpush1.msra.mxu0 0.0
    %206 = vmatprep.subr.mxu0 0.0
    %207 = vmatpush1.msra.mxu0 0.0
    %208 = vmatprep.mubr.f32.mxu0 0.0
    %209 = vmatmul.mubr.f32.gmra.mrb[0].mxu0 %v142
    %v210 = vpop.f32.mrb[0].mxu0
    %v211 = vadd.f32 %v139, %v210
    %v212 = vpop.f32.mrb[0].mxu0
    %213 = vdwg.mxu0
    %vm214 = vcmask 293888
    %215 = vst.msk [vmem:[#allocation2] sm:$0xff] %vm214, %v211
    // Predicated region
    $region22: #{tpu_custom_call.1} parent=1 // pred_check
      _
    $region23: #{tpu_custom_call.1} parent=1 // pred_check_branch
      %217 = sbr.rel (0) target = $region25
    $region24: #{tpu_custom_call.1} parent=1 // pred_region
      %s219 = ssub.s32 128, 128
      %220 = vsyncadd [#allocation3], %s219
      %s222 = sshll.u32 [#allocation2], 4
      %s223 = int_to_ptr.vmem [resolvable:$true] %s222
      %225 = dma.vmem_to_hbm [thread:$0]  %s223, 128, %s5, [#allocation3]
    $region25: #{tpu_custom_call.1} parent=1 // pred_fallthru
      _
    // Predicated region
    $region26: #{tpu_custom_call.1} parent=1 // pred_check
      _
    $region27: #{tpu_custom_call.1} parent=1 // pred_check_branch
      %227 = sbr.rel (0) target = $region29
    $region28: #{tpu_custom_call.1} parent=1 // pred_region
      %228 = dma.done [#allocation3], 128
    $region29: #{tpu_custom_call.1} parent=1 // pred_fallthru
      _
    %229 = vsyncpa [#allocation3], 1

</llo_original>
